<compile_context>
chip_gen: v7x
topology: tpu7x:2x2x1
jax: 0.10.0
libtpu: 0.0.40
codegen_flags: <defaults>
</compile_context>

<pallas_src>
import functools

import jax
import jax.numpy as jnp
from jax import lax
from jax.experimental import pallas as pl
from jax.experimental.pallas import tpu as pltpu


def _round_up(x, m):
    return ((x + m - 1) // m) * m


def _dist_loss_kernel(emb_ref, w_ref, lab_ref, out_ref,
                      m_sc, l_sc, tgt_sc,
                      *, n_valid, c_valid, tile_n, tile_c):
    # emb_ref: (tile_n, D) bf16   w_ref: (tile_c, D) bf16
    # lab_ref: (tile_n, 1) i32    out_ref: (tile_n, 1) f32
    # scratch: m_sc / l_sc / tgt_sc (tile_n, 1) f32
    n_idx = pl.program_id(0)
    c_idx = pl.program_id(1)

    @pl.when(c_idx == 0)
    def _init():
        m_sc[...] = jnp.full_like(m_sc, -jnp.inf)
        l_sc[...] = jnp.zeros_like(l_sc)
        tgt_sc[...] = jnp.zeros_like(tgt_sc)

    # MXU matmul, contracting on D directly (W stays (C, D), no transpose).
    logits = lax.dot_general(
        emb_ref[...], w_ref[...],
        dimension_numbers=(((1,), (1,)), ((), ())),
        preferred_element_type=jnp.float32)                    # (tile_n, tile_c) f32

    # Mask padded class columns (global col >= c_valid).
    col = lax.broadcasted_iota(jnp.int32, logits.shape, 1) + c_idx * tile_c
    logits = jnp.where(col < c_valid, logits, jnp.float32(-1e30))

    # Accumulate the target-class logit per row (labels are global class ids).
    lab = lab_ref[...]                                         # (tile_n, 1) i32
    tgt_sc[...] += jnp.sum(jnp.where(col == lab, logits, 0.0),
                           axis=-1, keepdims=True)

    # Online logsumexp over the streamed class axis.
    m_prev = m_sc[...]
    m_new = jnp.maximum(m_prev, jnp.max(logits, axis=-1, keepdims=True))
    alpha = jnp.exp(m_prev - m_new)
    p = jnp.exp(logits - m_new)
    l_sc[...] = alpha * l_sc[...] + jnp.sum(p, axis=-1, keepdims=True)
    m_sc[...] = m_new

    @pl.when(c_idx == pl.num_programs(1) - 1)
    def _finalize():
        per_row = m_sc[...] + jnp.log(l_sc[...]) - tgt_sc[...]  # (tile_n, 1) CE
        row = lax.broadcasted_iota(jnp.int32, per_row.shape, 0) + n_idx * tile_n
        # zero-out padded rows so the wrapper can just sum and divide by N
        out_ref[...] = jnp.where(row < n_valid, per_row, 0.0)


def distributed_loss_wrapper_forward(embeddings, labels, proxy_weight,
                                     *, tile_n=256, tile_c=512):
    """Forward of DistributedLossWrapper on a single device.

    embeddings:   (N, D) float
    labels:       (N,)   int class ids
    proxy_weight: (C, D) float (parameters of the wrapped loss)
    returns scalar float32 loss = mean cross-entropy over the (gathered) batch.
    """
    N, D = embeddings.shape
    C, D2 = proxy_weight.shape
    assert D == D2

    # Shrink tiles for tiny problems, keep sublane/lane alignment.
    tile_n = min(tile_n, _round_up(N, 8))
    tile_c = min(tile_c, _round_up(C, 128))
    n_pad = _round_up(N, tile_n)
    c_pad = _round_up(C, tile_c)

    # bf16 matmul operands (f32 accumulation inside the kernel); halves the
    # HBM traffic of the streamed inputs as a bonus.
    emb = jnp.asarray(embeddings, jnp.bfloat16)
    w = jnp.asarray(proxy_weight, jnp.bfloat16)
    lab = jnp.asarray(labels, jnp.int32).reshape(N, 1)

    if n_pad != N:
        emb = jnp.pad(emb, ((0, n_pad - N), (0, 0)))
        lab = jnp.pad(lab, ((0, n_pad - N), (0, 0)))
    if c_pad != C:
        w = jnp.pad(w, ((0, c_pad - C), (0, 0)))

    kernel = functools.partial(
        _dist_loss_kernel,
        n_valid=N, c_valid=C, tile_n=tile_n, tile_c=tile_c)

    per_row = pl.pallas_call(
        kernel,
        out_shape=jax.ShapeDtypeStruct((n_pad, 1), jnp.float32),
        grid_spec=pltpu.PrefetchScalarGridSpec(
            num_scalar_prefetch=0,
            grid=(n_pad // tile_n, c_pad // tile_c),
            in_specs=[
                pl.BlockSpec((tile_n, D), lambda n, c: (n, 0)),   # embeddings
                pl.BlockSpec((tile_c, D), lambda n, c: (c, 0)),   # proxy W (C, D)
                pl.BlockSpec((tile_n, 1), lambda n, c: (n, 0)),   # labels
            ],
            out_specs=pl.BlockSpec((tile_n, 1), lambda n, c: (n, 0)),
            scratch_shapes=[pltpu.VMEM((tile_n, 1), jnp.float32),   # m
                            pltpu.VMEM((tile_n, 1), jnp.float32),   # l
                            pltpu.VMEM((tile_n, 1), jnp.float32)],  # tgt
        ),
        compiler_params=pltpu.CompilerParams(
            dimension_semantics=("parallel", "arbitrary")),
    )(emb, w, lab)

    # all_gather is the identity on a single device, so the mean is over the
    # local (== global) batch N; padded rows were zeroed in-kernel.
    return jnp.sum(per_row) / jnp.float32(N)


def _reference_loss(embeddings, labels, proxy_weight):
    # Same bf16-operand / f32-accumulate matmul as the kernel for a tight check.
    logits = lax.dot_general(
        jnp.asarray(embeddings, jnp.bfloat16),
        jnp.asarray(proxy_weight, jnp.bfloat16),
        dimension_numbers=(((1,), (1,)), ((), ())),
        preferred_element_type=jnp.float32)
    logz = jax.nn.log_softmax(logits, axis=-1)
    return -jnp.mean(logz[jnp.arange(labels.shape[0]), labels])


if __name__ == "__main__":
    key = jax.random.PRNGKey(0)
    k_emb, k_w, k_lab = jax.random.split(key, 3)

    N, D, C = 24, 32, 300  # batch, embedding dim, num classes (proxies)

    embeddings = jax.random.normal(k_emb, (N, D), dtype=jnp.float32)
    labels = jax.random.randint(k_lab, (N,), 0, C, dtype=jnp.int32)
    proxy_weight = 0.05 * jax.random.normal(k_w, (C, D), dtype=jnp.float32)

    ref = _reference_loss(embeddings, labels, proxy_weight)

    # 1) default tiles (single-tile grid at these small shapes)
    loss_a = distributed_loss_wrapper_forward(embeddings, labels, proxy_weight)
    loss_a = jax.block_until_ready(loss_a)
    assert jnp.allclose(loss_a, ref, atol=1e-4, rtol=1e-4), (loss_a, ref)

    # 2) tiny tiles to exercise the N-parallel / C-streamed online-LSE path
    loss_b = distributed_loss_wrapper_forward(
        embeddings, labels, proxy_weight, tile_n=8, tile_c=128)
    loss_b = jax.block_until_ready(loss_b)
    assert jnp.allclose(loss_b, ref, atol=1e-4, rtol=1e-4), (loss_b, ref)

    print("KERNEL_OK")
</pallas_src>

<mosaic_0001>
module attributes {stable_mosaic.version = 11 : i64} {
  func.func @_dist_loss_kernel(%arg0: i32, %arg1: i32, %arg2: memref<24x32xbf16, #tpu.memory_space<vmem>>, %arg3: memref<384x32xbf16, #tpu.memory_space<vmem>>, %arg4: memref<24x1xi32, #tpu.memory_space<vmem>>, %arg5: memref<24x1xf32, #tpu.memory_space<vmem>>, %arg6: memref<24x1xf32, #tpu.memory_space<vmem>>, %arg7: memref<24x1xf32, #tpu.memory_space<vmem>>, %arg8: memref<24x1xf32, #tpu.memory_space<vmem>>) attributes {dimension_semantics = [#tpu.dimension_semantics<parallel>, #tpu.dimension_semantics<arbitrary>], iteration_bounds = array<i64: 1, 1>, scalar_prefetch = 0 : i64, scratch_operands = 3 : i64, tpu.core_type = #tpu.core_type<tc>, window_params = [{transform_indices = @transform_0, window_bounds = array<i64: 24, 32>}, {transform_indices = @transform_1, window_bounds = array<i64: 384, 32>}, {transform_indices = @transform_2, window_bounds = array<i64: 24, 1>}, {transform_indices = @transform_3, window_bounds = array<i64: 24, 1>}]} {
    %c0_i32 = arith.constant 0 : i32
    %0 = arith.cmpi eq, %arg1, %c0_i32 : i32
    %1 = arith.extui %0 : i1 to i32
    %c0_i32_0 = arith.constant 0 : i32
    %2 = arith.cmpi ne, %1, %c0_i32_0 : i32
    scf.if %2 {
      %cst_25 = arith.constant 0xFF800000 : f32
      %43 = vector.broadcast %cst_25 : f32 to vector<24x1xf32>
      %c0_26 = arith.constant 0 : index
      %c0_27 = arith.constant 0 : index
      %44 = vector.load %arg6[%c0_26, %c0_27] : memref<24x1xf32, #tpu.memory_space<vmem>>, vector<24x1xf32>
      tpu.vector_store %arg6[%c0_26, %c0_27], %43 {strides = array<i32>} : memref<24x1xf32, #tpu.memory_space<vmem>>, vector<24x1xf32>,
      %cst_28 = arith.constant 0.000000e+00 : f32
      %45 = vector.broadcast %cst_28 : f32 to vector<24x1xf32>
      %c0_29 = arith.constant 0 : index
      %c0_30 = arith.constant 0 : index
      %46 = vector.load %arg7[%c0_29, %c0_30] : memref<24x1xf32, #tpu.memory_space<vmem>>, vector<24x1xf32>
      tpu.vector_store %arg7[%c0_29, %c0_30], %45 {strides = array<i32>} : memref<24x1xf32, #tpu.memory_space<vmem>>, vector<24x1xf32>,
      %cst_31 = arith.constant 0.000000e+00 : f32
      %47 = vector.broadcast %cst_31 : f32 to vector<24x1xf32>
      %c0_32 = arith.constant 0 : index
      %c0_33 = arith.constant 0 : index
      %48 = vector.load %arg8[%c0_32, %c0_33] : memref<24x1xf32, #tpu.memory_space<vmem>>, vector<24x1xf32>
      tpu.vector_store %arg8[%c0_32, %c0_33], %47 {strides = array<i32>} : memref<24x1xf32, #tpu.memory_space<vmem>>, vector<24x1xf32>,
    } else {
    }
    %c0 = arith.constant 0 : index
    %c0_1 = arith.constant 0 : index
    %3 = vector.load %arg2[%c0, %c0_1] : memref<24x32xbf16, #tpu.memory_space<vmem>>, vector<24x32xbf16>
    %c0_2 = arith.constant 0 : index
    %c0_3 = arith.constant 0 : index
    %4 = vector.load %arg3[%c0_2, %c0_3] : memref<384x32xbf16, #tpu.memory_space<vmem>>, vector<384x32xbf16>
    %cst = arith.constant dense<0.000000e+00> : vector<24x384xf32>
    %5 = tpu.matmul %3, %4, %cst {dimension_numbers = #tpu.dot_dimension_numbers<[1], [1], [0], [0], [0, 0, 1, 0], [], []>} : vector<24x32xbf16>, vector<384x32xbf16>, vector<24x384xf32> -> vector<24x384xf32>
    %6 = tpu.iota {dimensions = array<i32: 1>} : vector<24x384xi32>
    %c384_i32 = arith.constant 384 : i32
    %7 = arith.muli %arg1, %c384_i32 : i32
    %8 = vector.broadcast %7 : i32 to vector<24x384xi32>
    %9 = arith.addi %6, %8 : vector<24x384xi32>
    %c300_i32 = arith.constant 300 : i32
    %10 = vector.broadcast %c300_i32 : i32 to vector<24x384xi32>
    %11 = arith.cmpi slt, %9, %10 : vector<24x384xi32>
    %cst_4 = arith.constant -1.000000e+30 : f32
    %12 = vector.broadcast %cst_4 : f32 to vector<24x384xf32>
    %13 = arith.select %11, %5, %12 : vector<24x384xi1>, vector<24x384xf32>
    %c0_5 = arith.constant 0 : index
    %c0_6 = arith.constant 0 : index
    %14 = vector.load %arg4[%c0_5, %c0_6] : memref<24x1xi32, #tpu.memory_space<vmem>>, vector<24x1xi32>
    %c0_7 = arith.constant 0 : index
    %c0_8 = arith.constant 0 : index
    %15 = vector.load %arg8[%c0_7, %c0_8] : memref<24x1xf32, #tpu.memory_space<vmem>>, vector<24x1xf32>
    %16 = vector.broadcast %14 : vector<24x1xi32> to vector<24x384xi32>
    %17 = arith.cmpi eq, %9, %16 : vector<24x384xi32>
    %cst_9 = arith.constant 0.000000e+00 : f32
    %18 = vector.broadcast %cst_9 : f32 to vector<24x384xf32>
    %19 = arith.select %17, %13, %18 : vector<24x384xi1>, vector<24x384xf32>
    %cst_10 = arith.constant dense<0.000000e+00> : vector<24xf32>
    %20 = vector.multi_reduction <add>, %19, %cst_10 [1] : vector<24x384xf32> to vector<24xf32>
    %21 = vector.shape_cast %20 : vector<24xf32> to vector<24x1xf32>
    %22 = arith.addf %15, %21 : vector<24x1xf32>
    %c0_11 = arith.constant 0 : index
    %c0_12 = arith.constant 0 : index
    %23 = vector.load %arg8[%c0_11, %c0_12] : memref<24x1xf32, #tpu.memory_space<vmem>>, vector<24x1xf32>
    tpu.vector_store %arg8[%c0_11, %c0_12], %22 {strides = array<i32>} : memref<24x1xf32, #tpu.memory_space<vmem>>, vector<24x1xf32>,
    %c0_13 = arith.constant 0 : index
    %c0_14 = arith.constant 0 : index
    %24 = vector.load %arg6[%c0_13, %c0_14] : memref<24x1xf32, #tpu.memory_space<vmem>>, vector<24x1xf32>
    %cst_15 = arith.constant dense<0xFF800000> : vector<24xf32>
    %25 = vector.multi_reduction <maximumf>, %13, %cst_15 [1] : vector<24x384xf32> to vector<24xf32>
    %26 = vector.shape_cast %25 : vector<24xf32> to vector<24x1xf32>
    %27 = arith.maximumf %24, %26 : vector<24x1xf32>
    %28 = arith.subf %24, %27 : vector<24x1xf32>
    %29 = math.exp %28 : vector<24x1xf32>
    %30 = vector.broadcast %27 : vector<24x1xf32> to vector<24x384xf32>
    %31 = arith.subf %13, %30 : vector<24x384xf32>
    %32 = math.exp %31 : vector<24x384xf32>
    %c0_16 = arith.constant 0 : index
    %c0_17 = arith.constant 0 : index
    %33 = vector.load %arg7[%c0_16, %c0_17] : memref<24x1xf32, #tpu.memory_space<vmem>>, vector<24x1xf32>
    %34 = arith.mulf %29, %33 : vector<24x1xf32>
    %cst_18 = arith.constant dense<0.000000e+00> : vector<24xf32>
    %35 = vector.multi_reduction <add>, %32, %cst_18 [1] : vector<24x384xf32> to vector<24xf32>
    %36 = vector.shape_cast %35 : vector<24xf32> to vector<24x1xf32>
    %37 = arith.addf %34, %36 : vector<24x1xf32>
    %c0_19 = arith.constant 0 : index
    %c0_20 = arith.constant 0 : index
    %38 = vector.load %arg7[%c0_19, %c0_20] : memref<24x1xf32, #tpu.memory_space<vmem>>, vector<24x1xf32>
    tpu.vector_store %arg7[%c0_19, %c0_20], %37 {strides = array<i32>} : memref<24x1xf32, #tpu.memory_space<vmem>>, vector<24x1xf32>,
    %c0_21 = arith.constant 0 : index
    %c0_22 = arith.constant 0 : index
    %39 = vector.load %arg6[%c0_21, %c0_22] : memref<24x1xf32, #tpu.memory_space<vmem>>, vector<24x1xf32>
    tpu.vector_store %arg6[%c0_21, %c0_22], %27 {strides = array<i32>} : memref<24x1xf32, #tpu.memory_space<vmem>>, vector<24x1xf32>,
    %c0_i32_23 = arith.constant 0 : i32
    %40 = arith.cmpi eq, %arg1, %c0_i32_23 : i32
    %41 = arith.extui %40 : i1 to i32
    %c0_i32_24 = arith.constant 0 : i32
    %42 = arith.cmpi ne, %41, %c0_i32_24 : i32
    scf.if %42 {
      %c0_25 = arith.constant 0 : index
      %c0_26 = arith.constant 0 : index
      %43 = vector.load %arg6[%c0_25, %c0_26] : memref<24x1xf32, #tpu.memory_space<vmem>>, vector<24x1xf32>
      %c0_27 = arith.constant 0 : index
      %c0_28 = arith.constant 0 : index
      %44 = vector.load %arg7[%c0_27, %c0_28] : memref<24x1xf32, #tpu.memory_space<vmem>>, vector<24x1xf32>
      %45 = math.log %44 : vector<24x1xf32>
      %46 = arith.addf %43, %45 : vector<24x1xf32>
      %c0_29 = arith.constant 0 : index
      %c0_30 = arith.constant 0 : index
      %47 = vector.load %arg8[%c0_29, %c0_30] : memref<24x1xf32, #tpu.memory_space<vmem>>, vector<24x1xf32>
      %48 = arith.subf %46, %47 : vector<24x1xf32>
      %49 = tpu.iota {dimensions = array<i32: 0>} : vector<24x1xi32>
      %c24_i32 = arith.constant 24 : i32
      %50 = arith.muli %arg0, %c24_i32 : i32
      %51 = vector.broadcast %50 : i32 to vector<24x1xi32>
      %52 = arith.addi %49, %51 : vector<24x1xi32>
      %c24_i32_31 = arith.constant 24 : i32
      %53 = vector.broadcast %c24_i32_31 : i32 to vector<24x1xi32>
      %54 = arith.cmpi slt, %52, %53 : vector<24x1xi32>
      %cst_32 = arith.constant 0.000000e+00 : f32
      %55 = vector.broadcast %cst_32 : f32 to vector<24x1xf32>
      %56 = arith.select %54, %48, %55 : vector<24x1xi1>, vector<24x1xf32>
      %c0_33 = arith.constant 0 : index
      %c0_34 = arith.constant 0 : index
      %57 = vector.load %arg5[%c0_33, %c0_34] : memref<24x1xf32, #tpu.memory_space<vmem>>, vector<24x1xf32>
      tpu.vector_store %arg5[%c0_33, %c0_34], %56 {strides = array<i32>} : memref<24x1xf32, #tpu.memory_space<vmem>>, vector<24x1xf32>,
    } else {
    }
    return
  }
  func.func @transform_0(%arg0: i32, %arg1: i32) -> (i32, i32) {
    %c0_i32 = arith.constant 0 : i32
    %c0_i32_0 = arith.constant 0 : i32
    return %arg0, %c0_i32 : i32, i32
  }
  func.func @transform_1(%arg0: i32, %arg1: i32) -> (i32, i32) {
    %c0_i32 = arith.constant 0 : i32
    %c0_i32_0 = arith.constant 0 : i32
    return %arg1, %c0_i32 : i32, i32
  }
  func.func @transform_2(%arg0: i32, %arg1: i32) -> (i32, i32) {
    %c0_i32 = arith.constant 0 : i32
    %c0_i32_0 = arith.constant 0 : i32
    return %arg0, %c0_i32 : i32, i32
  }
  func.func @transform_3(%arg0: i32, %arg1: i32) -> (i32, i32) {
    %c0_i32 = arith.constant 0 : i32
    %c0_i32_0 = arith.constant 0 : i32
    return %arg0, %c0_i32 : i32, i32
  }
}

</mosaic_0001>

<llo_original>
// kernel: tpu_custom_call.1
$region0: #{tpu_custom_call.1}
  #allocation0 [shape = 'u32[]', space=smem, size = 0x4, offset = 0x4, fixed_abs, tag = 'smem constant byte address 0x4 - core index']
  #allocation1 [shape = 'u32[144,128]{1,0:T(1,128)}', space=vmem, size = 0x12000, scoped, tag = 'internal scratch']
  #allocation2 [shape = 'f32[24,1]{1,0:T(8,128)}', space=vmem, size = 0x3000, scoped, tag = 'scratch operand']
  #allocation3 [shape = 'f32[24,1]{1,0:T(8,128)}', space=vmem, size = 0x3000, scoped, tag = 'scratch operand']
  #allocation4 [shape = 'f32[24,1]{1,0:T(8,128)}', space=vmem, size = 0x3000, scoped, tag = 'scratch operand']
  %s0 = inlined_call_operand.vmem [shape: bf16[24,32], index: 0, kind: input, shape index: {}]
  %s1 = inlined_call_operand.vmem [shape: bf16[384,32], index: 1, kind: input, shape index: {}]
  %s2 = inlined_call_operand.vmem [shape: s32[24,1], index: 2, kind: input, shape index: {}]
  %s3 = inlined_call_operand.vmem [shape: f32[24,1], index: 3, kind: output, shape index: {}]
  %s4 = sld [smem:[#allocation0]]
  $region30: #{tpu_custom_call.1} parent=0
    _
  %s6 = ssub.s32 1, %s4
  %s7 = scalar_select 0, %s6, %s4
  // Predicated region
  $region2: #{tpu_custom_call.1} parent=0 // pred_check
    _
  $region3: #{tpu_custom_call.1} parent=0 // pred_check_branch
    %9 = sbr.rel (0) target = $region5
  $region4: #{tpu_custom_call.1} parent=0 // pred_region
    _
  $region5: #{tpu_custom_call.1} parent=0 // pred_fallthru
    _
  // Predicated region
  $region6: #{tpu_custom_call.1} parent=0 // pred_check
    _
  $region7: #{tpu_custom_call.1} parent=0 // pred_check_branch
    %11 = sbr.rel (0) target = $region9
  $region8: #{tpu_custom_call.1} parent=0 // pred_region
    _
  $region9: #{tpu_custom_call.1} parent=0 // pred_fallthru
    _
  // Predicated region
  $region10: #{tpu_custom_call.1} parent=0 // pred_check
    _
  $region11: #{tpu_custom_call.1} parent=0 // pred_check_branch
    %13 = sbr.rel (0) target = $region13
  $region12: #{tpu_custom_call.1} parent=0 // pred_region
    _
  $region13: #{tpu_custom_call.1} parent=0 // pred_fallthru
    _
  %p15 = scmp.eq.s32.totalorder 0, 0
  // Predicated region
  $region14: #{tpu_custom_call.1} parent=0 // pred_check
    %p16 = pneg %p15
  $region15: #{tpu_custom_call.1} parent=0 // pred_check_branch
    %18 = sbr.rel (%p16) target = $region17
  $region16: #{tpu_custom_call.1} parent=0 // pred_region
    %vm19 = vcmask 7168
    %20 = vst.msk [vmem:[#allocation2] sm:$0xff] %vm19, -inf
    %21 = vst.msk [vmem:[#allocation2 + $0x8] sm:$0xff] %vm19, -inf
    %22 = vst.msk [vmem:[#allocation2 + $0x10] sm:$0xff] %vm19, -inf
    %23 = vst.msk [vmem:[#allocation3] sm:$0xff] %vm19, 0.0
    %24 = vst.msk [vmem:[#allocation3 + $0x8] sm:$0xff] %vm19, 0.0
    %25 = vst.msk [vmem:[#allocation3 + $0x10] sm:$0xff] %vm19, 0.0
    %26 = vst.msk [vmem:[#allocation4] sm:$0xff] %vm19, 0.0
    %27 = vst.msk [vmem:[#allocation4 + $0x8] sm:$0xff] %vm19, 0.0
    %28 = vst.msk [vmem:[#allocation4 + $0x10] sm:$0xff] %vm19, 0.0
  $region17: #{tpu_custom_call.1} parent=0 // pred_fallthru
    _
  %v29 = vld [vmem:[%s0] sm:$0xf]
  %v30 = vld [vmem:[%s0 + $0x4] sm:$0xf]
  %v31 = vld [vmem:[%s0 + $0x8] sm:$0xf]
  %v32 = vld [vmem:[%s1] sm:$0xf]
  %v33 = vld [vmem:[%s1 + $0x4] sm:$0xf]
  %v34 = vld [vmem:[%s1 + $0x8] sm:$0xf]
  %v35 = vld [vmem:[%s1 + $0xc] sm:$0xf]
  %v36 = vld [vmem:[%s1 + $0x10] sm:$0xf]
  %v37 = vld [vmem:[%s1 + $0x14] sm:$0xf]
  %v38 = vld [vmem:[%s1 + $0x18] sm:$0xf]
  %v39 = vld [vmem:[%s1 + $0x1c] sm:$0xf]
  %v40 = vld [vmem:[%s1 + $0x20] sm:$0xf]
  %v41 = vld [vmem:[%s1 + $0x24] sm:$0xf]
  %v42 = vld [vmem:[%s1 + $0x28] sm:$0xf]
  %v43 = vld [vmem:[%s1 + $0x2c] sm:$0xf]
  %v44 = vld [vmem:[%s1 + $0x30] sm:$0xf]
  %v45 = vld [vmem:[%s1 + $0x34] sm:$0xf]
  %v46 = vld [vmem:[%s1 + $0x38] sm:$0xf]
  %v47 = vld [vmem:[%s1 + $0x3c] sm:$0xf]
  %v48 = vld [vmem:[%s1 + $0x40] sm:$0xf]
  %v49 = vld [vmem:[%s1 + $0x44] sm:$0xf]
  %v50 = vld [vmem:[%s1 + $0x48] sm:$0xf]
  %v51 = vld [vmem:[%s1 + $0x4c] sm:$0xf]
  %v52 = vld [vmem:[%s1 + $0x50] sm:$0xf]
  %v53 = vld [vmem:[%s1 + $0x54] sm:$0xf]
  %v54 = vld [vmem:[%s1 + $0x58] sm:$0xf]
  %v55 = vld [vmem:[%s1 + $0x5c] sm:$0xf]
  %v56 = vld [vmem:[%s1 + $0x60] sm:$0xf]
  %v57 = vld [vmem:[%s1 + $0x64] sm:$0xf]
  %v58 = vld [vmem:[%s1 + $0x68] sm:$0xf]
  %v59 = vld [vmem:[%s1 + $0x6c] sm:$0xf]
  %v60 = vld [vmem:[%s1 + $0x70] sm:$0xf]
  %v61 = vld [vmem:[%s1 + $0x74] sm:$0xf]
  %v62 = vld [vmem:[%s1 + $0x78] sm:$0xf]
  %v63 = vld [vmem:[%s1 + $0x7c] sm:$0xf]
  %v64 = vld [vmem:[%s1 + $0x80] sm:$0xf]
  %v65 = vld [vmem:[%s1 + $0x84] sm:$0xf]
  %v66 = vld [vmem:[%s1 + $0x88] sm:$0xf]
  %v67 = vld [vmem:[%s1 + $0x8c] sm:$0xf]
  %v68 = vld [vmem:[%s1 + $0x90] sm:$0xf]
  %v69 = vld [vmem:[%s1 + $0x94] sm:$0xf]
  %v70 = vld [vmem:[%s1 + $0x98] sm:$0xf]
  %v71 = vld [vmem:[%s1 + $0x9c] sm:$0xf]
  %v72 = vld [vmem:[%s1 + $0xa0] sm:$0xf]
  %v73 = vld [vmem:[%s1 + $0xa4] sm:$0xf]
  %v74 = vld [vmem:[%s1 + $0xa8] sm:$0xf]
  %v75 = vld [vmem:[%s1 + $0xac] sm:$0xf]
  %v76 = vld [vmem:[%s1 + $0xb0] sm:$0xf]
  %v77 = vld [vmem:[%s1 + $0xb4] sm:$0xf]
  %v78 = vld [vmem:[%s1 + $0xb8] sm:$0xf]
  %v79 = vld [vmem:[%s1 + $0xbc] sm:$0xf]
  %v83 = vunpack.c.l.b16 %v29
  %v84 = vunpack.c.l.b16 %v30
  %v85 = vunpack.c.l.b16 %v31
  %v86 = vpack.c.b16 %v84, %v83
  %v87 = vpack.c.b16 %v85, %v85
  %v136 = vunpack.c.l.b16 %v32
  %v137 = vunpack.c.l.b16 %v33
  %v138 = vunpack.c.l.b16 %v34
  %v139 = vunpack.c.l.b16 %v35
  %v140 = vunpack.c.l.b16 %v36
  %v141 = vunpack.c.l.b16 %v37
  %v142 = vunpack.c.l.b16 %v38
  %v143 = vunpack.c.l.b16 %v39
  %v144 = vunpack.c.l.b16 %v40
  %v145 = vunpack.c.l.b16 %v41
  %v146 = vunpack.c.l.b16 %v42
  %v147 = vunpack.c.l.b16 %v43
  %v148 = vunpack.c.l.b16 %v44
  %v149 = vunpack.c.l.b16 %v45
  %v150 = vunpack.c.l.b16 %v46
  %v151 = vunpack.c.l.b16 %v47
  %v152 = vunpack.c.l.b16 %v48
  %v153 = vunpack.c.l.b16 %v49
  %v154 = vunpack.c.l.b16 %v50
  %v155 = vunpack.c.l.b16 %v51
  %v156 = vunpack.c.l.b16 %v52
  %v157 = vunpack.c.l.b16 %v53
  %v158 = vunpack.c.l.b16 %v54
  %v159 = vunpack.c.l.b16 %v55
  %v160 = vunpack.c.l.b16 %v56
  %v161 = vunpack.c.l.b16 %v57
  %v162 = vunpack.c.l.b16 %v58
  %v163 = vunpack.c.l.b16 %v59
  %v164 = vunpack.c.l.b16 %v60
  %v165 = vunpack.c.l.b16 %v61
  %v166 = vunpack.c.l.b16 %v62
  %v167 = vunpack.c.l.b16 %v63
  %v168 = vunpack.c.l.b16 %v64
  %v169 = vunpack.c.l.b16 %v65
  %v170 = vunpack.c.l.b16 %v66
  %v171 = vunpack.c.l.b16 %v67
  %v172 = vunpack.c.l.b16 %v68
  %v173 = vunpack.c.l.b16 %v69
  %v174 = vunpack.c.l.b16 %v70
  %v175 = vunpack.c.l.b16 %v71
  %v176 = vunpack.c.l.b16 %v72
  %v177 = vunpack.c.l.b16 %v73
  %v178 = vunpack.c.l.b16 %v74
  %v179 = vunpack.c.l.b16 %v75
  %v180 = vunpack.c.l.b16 %v76
  %v181 = vunpack.c.l.b16 %v77
  %v182 = vunpack.c.l.b16 %v78
  %v183 = vunpack.c.l.b16 %v79
  %v184 = vpack.c.b16 %v137, %v136
  %v185 = vpack.c.b16 %v139, %v138
  %v186 = vpack.c.b16 %v141, %v140
  %v187 = vpack.c.b16 %v143, %v142
  %v188 = vpack.c.b16 %v145, %v144
  %v189 = vpack.c.b16 %v147, %v146
  %v190 = vpack.c.b16 %v149, %v148
  %v191 = vpack.c.b16 %v151, %v150
  %v192 = vpack.c.b16 %v153, %v152
  %v193 = vpack.c.b16 %v155, %v154
  %v194 = vpack.c.b16 %v157, %v156
  %v195 = vpack.c.b16 %v159, %v158
  %v196 = vpack.c.b16 %v161, %v160
  %v197 = vpack.c.b16 %v163, %v162
  %v198 = vpack.c.b16 %v165, %v164
  %v199 = vpack.c.b16 %v167, %v166
  %v200 = vpack.c.b16 %v169, %v168
  %v201 = vpack.c.b16 %v171, %v170
  %v202 = vpack.c.b16 %v173, %v172
  %v203 = vpack.c.b16 %v175, %v174
  %v204 = vpack.c.b16 %v177, %v176
  %v205 = vpack.c.b16 %v179, %v178
  %v206 = vpack.c.b16 %v181, %v180
  %v207 = vpack.c.b16 %v183, %v182
  %vm208 = vcmask 261120
  %v210 = vsel %vm208, %v86, 0
  %v213 = vsel %vm208, %v87, 0
  %v216 = vsel %vm208, %v184, 0
  %v219 = vsel %vm208, %v185, 0
  %v222 = vsel %vm208, %v186, 0
  %v225 = vsel %vm208, %v187, 0
  %v228 = vsel %vm208, %v188, 0
  %v231 = vsel %vm208, %v189, 0
  %v234 = vsel %vm208, %v190, 0
  %v237 = vsel %vm208, %v191, 0
  %v240 = vsel %vm208, %v192, 0
  %v243 = vsel %vm208, %v193, 0
  %v246 = vsel %vm208, %v194, 0
  %v249 = vsel %vm208, %v195, 0
  %v252 = vsel %vm208, %v196, 0
  %v255 = vsel %vm208, %v197, 0
  %v258 = vsel %vm208, %v198, 0
  %v261 = vsel %vm208, %v199, 0
  %v264 = vsel %vm208, %v200, 0
  %v267 = vsel %vm208, %v201, 0
  %v270 = vsel %vm208, %v202, 0
  %v273 = vsel %vm208, %v203, 0
  %v276 = vsel %vm208, %v204, 0
  %v279 = vsel %vm208, %v205, 0
  %v282 = vsel %vm208, %v206, 0
  %v285 = vsel %vm208, %v207, 0
  %287 = vmatprep.subr.bf16.mxu0 0
  %288 = vmatpush1.bf16.xpose.msra.mxu0 %v216
  %289 = vmatprep.subr.bf16.mxu0 0
  %290 = vmatpush1.bf16.xpose.msra.mxu0 %v219
  %291 = vmatprep.subr.bf16.mxu0 0
  %292 = vmatpush1.bf16.xpose.msra.mxu0 %v222
  %293 = vmatprep.subr.bf16.mxu0 0
  %294 = vmatpush1.bf16.xpose.msra.mxu0 %v225
  %295 = vmatprep.subr.bf16.mxu0 0
  %296 = vmatpush1.bf16.xpose.msra.mxu0 %v228
  %297 = vmatprep.subr.bf16.mxu0 0
  %298 = vmatpush1.bf16.xpose.msra.mxu0 %v231
  %299 = vmatprep.subr.bf16.mxu0 0
  %300 = vmatpush1.bf16.xpose.msra.mxu0 %v234
  %301 = vmatprep.subr.bf16.mxu0 0
  %302 = vmatpush1.bf16.xpose.msra.mxu0 %v237
  %303 = vmatprep.subr.bf16.mxu0 0
  %304 = vmatpush1.bf16.xpose.msra.mxu0 %v240
  %305 = vmatprep.subr.bf16.mxu0 0
  %306 = vmatpush1.bf16.xpose.msra.mxu0 %v243
  %307 = vmatprep.subr.bf16.mxu0 0
  %308 = vmatpush1.bf16.xpose.msra.mxu0 %v246
  %309 = vmatprep.subr.bf16.mxu0 0
  %310 = vmatpush1.bf16.xpose.msra.mxu0 %v249
  %311 = vmatprep.subr.bf16.mxu0 0
  %312 = vmatpush1.bf16.xpose.msra.mxu0 %v252
  %313 = vmatprep.subr.bf16.mxu0 0
  %314 = vmatpush1.bf16.xpose.msra.mxu0 %v255
  %315 = vmatprep.subr.bf16.mxu0 0
  %316 = vmatpush1.bf16.xpose.msra.mxu0 %v258
  %317 = vmatprep.subr.bf16.mxu0 0
  %318 = vmatpush1.bf16.xpose.msra.mxu0 %v261
  %319 = vmatprep.mubr.bf16.mxu0 0
  %320 = vmatmul.mubr.bf16.gmra.mrb[0].mxu0 %v210
  %v321 = vpop.f32.mrb[0].mxu0
  %v322 = vadd.f32 0.0, %v321
  %v323 = vpop.f32.mrb[0].mxu0
  %v324 = vadd.f32 0.0, %v323
  %v325 = vpop.f32.mrb[0].mxu0
  %v326 = vadd.f32 0.0, %v325
  %v327 = vpop.f32.mrb[0].mxu0
  %v328 = vadd.f32 0.0, %v327
  %329 = vmatprep.mubr.bf16.mxu0 0
  %330 = vmatmul.mubr.bf16.gmra.mrb[0].mxu0 %v213
  %v331 = vpop.f32.mrb[0].mxu0
  %v332 = vadd.f32 0.0, %v331
  %v333 = vpop.f32.mrb[0].mxu0
  %v334 = vadd.f32 0.0, %v333
  %v335 = vpop.f32.mrb[0].mxu0
  %v336 = vpop.f32.mrb[0].mxu0
  %337 = vdwg.mxu0
  %338 = vmatprep.subr.bf16.mxu0 0
  %339 = vmatpush1.bf16.xpose.msra.mxu0 %v264
  %340 = vmatprep.subr.bf16.mxu0 0
  %341 = vmatpush1.bf16.xpose.msra.mxu0 %v267
  %342 = vmatprep.subr.bf16.mxu0 0
  %343 = vmatpush1.bf16.xpose.msra.mxu0 %v270
  %344 = vmatprep.subr.bf16.mxu0 0
  %345 = vmatpush1.bf16.xpose.msra.mxu0 %v273
  %346 = vmatprep.subr.bf16.mxu0 0
  %347 = vmatpush1.bf16.xpose.msra.mxu0 %v276
  %348 = vmatprep.subr.bf16.mxu0 0
  %349 = vmatpush1.bf16.xpose.msra.mxu0 %v279
  %350 = vmatprep.subr.bf16.mxu0 0
  %351 = vmatpush1.bf16.xpose.msra.mxu0 %v282
  %352 = vmatprep.subr.bf16.mxu0 0
  %353 = vmatpush1.bf16.xpose.msra.mxu0 %v285
  %354 = vmatprep.subr.bf16.mxu0 0
  %355 = vmatpush1.bf16.xpose.msra.mxu0 0
  %356 = vmatprep.subr.bf16.mxu0 0
  %357 = vmatpush1.bf16.xpose.msra.mxu0 0
  %358 = vmatprep.subr.bf16.mxu0 0
  %359 = vmatpush1.bf16.xpose.msra.mxu0 0
  %360 = vmatprep.subr.bf16.mxu0 0
  %361 = vmatpush1.bf16.xpose.msra.mxu0 0
  %362 = vmatprep.subr.bf16.mxu0 0
  %363 = vmatpush1.bf16.xpose.msra.mxu0 0
  %364 = vmatprep.subr.bf16.mxu0 0
  %365 = vmatpush1.bf16.xpose.msra.mxu0 0
  %366 = vmatprep.subr.bf16.mxu0 0
  %367 = vmatpush1.bf16.xpose.msra.mxu0 0
  %368 = vmatprep.subr.bf16.mxu0 0
  %369 = vmatpush1.bf16.xpose.msra.mxu0 0
  %370 = vmatprep.mubr.bf16.mxu0 0
  %371 = vmatmul.mubr.bf16.gmra.mrb[0].mxu0 %v210
  %v372 = vpop.f32.mrb[0].mxu0
  %v373 = vadd.f32 0.0, %v372
  %v374 = vpop.f32.mrb[0].mxu0
  %v375 = vpop.f32.mrb[0].mxu0
  %v376 = vadd.f32 0.0, %v375
  %v377 = vpop.f32.mrb[0].mxu0
  %378 = vmatprep.mubr.bf16.mxu0 0
  %379 = vmatmul.mubr.bf16.gmra.mrb[0].mxu0 %v213
  %v380 = vpop.f32.mrb[0].mxu0
  %v381 = vadd.f32 0.0, %v380
  %v382 = vpop.f32.mrb[0].mxu0
  %v383 = vpop.f32.mrb[0].mxu0
  %v384 = vpop.f32.mrb[0].mxu0
  %385 = vdwg.mxu0
  %v386 = vlaneseq
  %v387 = vand.u32 %v386, 127
  %v388 = vadd.s32 %v387, 128
  %v389 = vadd.s32 %v387, 256
  %s390 = smul.u32 0, 384
  %v391 = vstv %s390
  %v392 = vadd.s32 %v387, %v391
  %v393 = vadd.s32 %v388, %v391
  %v394 = vadd.s32 %v389, %v391
  %vm395 = vcmp.lt.s32.totalorder %v392, 300
  %vm396 = vcmp.lt.s32.totalorder %v393, 300
  %vm397 = vcmp.lt.s32.totalorder %v394, 300
  %v398 = vsel %vm395, %v322, -1e+30
  %v399 = vsel %vm396, %v324, -1e+30
  %v400 = vsel %vm397, %v373, -1e+30
  %v401 = vsel %vm395, %v326, -1e+30
  %v402 = vsel %vm396, %v328, -1e+30
  %v403 = vsel %vm397, %v376, -1e+30
  %v404 = vsel %vm395, %v332, -1e+30
  %v405 = vsel %vm396, %v334, -1e+30
  %v406 = vsel %vm397, %v381, -1e+30
  %v407 = vld [vmem:[%s2] sm:$0xff]
  %v408 = vld [vmem:[%s2 + $0x8] sm:$0xff]
  %v409 = vld [vmem:[%s2 + $0x10] sm:$0xff]
  %v410 = vld [vmem:[#allocation4] sm:$0xff]
  %v411 = vld [vmem:[#allocation4 + $0x8] sm:$0xff]
  %v412 = vld [vmem:[#allocation4 + $0x10] sm:$0xff]
  %413 = vset.pattern.permute.xlu0 0
  %414 = vperm.xlu0 %413, %v407
  %v415 = vpop.permute.xlu0 %414
  %416 = vset.pattern.permute.xlu0 0
  %417 = vperm.xlu0 %416, %v408
  %v418 = vpop.permute.xlu0 %417
  %419 = vset.pattern.permute.xlu0 0
  %420 = vperm.xlu0 %419, %v409
  %v421 = vpop.permute.xlu0 %420
  %vm422 = vcmp.eq.s32.totalorder %v392, %v415
  %vm423 = vcmp.eq.s32.totalorder %v393, %v415
  %vm424 = vcmp.eq.s32.totalorder %v394, %v415
  %vm425 = vcmp.eq.s32.totalorder %v392, %v418
  %vm426 = vcmp.eq.s32.totalorder %v393, %v418
  %vm427 = vcmp.eq.s32.totalorder %v394, %v418
  %vm428 = vcmp.eq.s32.totalorder %v392, %v421
  %vm429 = vcmp.eq.s32.totalorder %v393, %v421
  %vm430 = vcmp.eq.s32.totalorder %v394, %v421
  %v431 = vsel %vm422, %v398, 0.0
  %v432 = vsel %vm423, %v399, 0.0
  %v433 = vsel %vm424, %v400, 0.0
  %v434 = vsel %vm425, %v401, 0.0
  %v435 = vsel %vm426, %v402, 0.0
  %v436 = vsel %vm427, %v403, 0.0
  %v437 = vsel %vm428, %v404, 0.0
  %v438 = vsel %vm429, %v405, 0.0
  %v439 = vsel %vm430, %v406, 0.0
  %v440 = vadd.f32 %v431, %v432
  %v441 = vadd.f32 %v440, %v433
  %442 = vadd.xlane.f32.xlu0 %v441
  %v443 = vpop.xlane.xlu0 %442
  %v444 = vadd.f32 %v434, %v435
  %v445 = vadd.f32 %v444, %v436
  %446 = vadd.xlane.f32.xlu0 %v445
  %v447 = vpop.xlane.xlu0 %446
  %v448 = vadd.f32 %v437, %v438
  %v449 = vadd.f32 %v448, %v439
  %450 = vadd.xlane.f32.xlu0 %v449
  %v451 = vpop.xlane.xlu0 %450
  %v452 = vadd.f32 %v410, %v443
  %v453 = vadd.f32 %v411, %v447
  %v454 = vadd.f32 %v412, %v451
  %vm455 = vcmask 7168
  %456 = vst.msk [vmem:[#allocation4] sm:$0xff] %vm455, %v452
  %457 = vst.msk [vmem:[#allocation4 + $0x8] sm:$0xff] %vm455, %v453
  %458 = vst.msk [vmem:[#allocation4 + $0x10] sm:$0xff] %vm455, %v454
  %v459 = vld [vmem:[#allocation2] sm:$0xff]
  %v460 = vld [vmem:[#allocation2 + $0x8] sm:$0xff]
  %v461 = vld [vmem:[#allocation2 + $0x10] sm:$0xff]
  %v462 = vmax.f32 %v398, %v400
  %v463 = vmax.f32 %v462, %v399
  %464 = vmax.xlane.f32.xlu0 %v463
  %v465 = vpop.xlane.xlu0 %464
  %v466 = vmax.f32 %v401, %v403
  %v467 = vmax.f32 %v466, %v402
  %468 = vmax.xlane.f32.xlu0 %v467
  %v469 = vpop.xlane.xlu0 %468
  %v470 = vmax.f32 %v404, %v406
  %v471 = vmax.f32 %v470, %v405
  %472 = vmax.xlane.f32.xlu0 %v471
  %v473 = vpop.xlane.xlu0 %472
  %v474 = vmax.f32 %v459, %v465
  %v475 = vmax.f32 %v460, %v469
  %v476 = vmax.f32 %v461, %v473
  %v477 = vsub.f32 %v459, %v474
  %v478 = vsub.f32 %v460, %v475
  %v479 = vsub.f32 %v461, %v476
  %v480 = vmul.f32 %v477, 1.442695
  %v481 = vpow.pop %v480
  %v482 = vmul.f32 %v478, 1.442695
  %v483 = vpow.pop %v482
  %v484 = vmul.f32 %v479, 1.442695
  %v485 = vpow.pop %v484
  %487 = vset.pattern.permute.xlu0 0
  %488 = vperm.xlu0 %487, %v474
  %v489 = vpop.permute.xlu0 %488
  %492 = vset.pattern.permute.xlu0 0
  %493 = vperm.xlu0 %492, %v475
  %v494 = vpop.permute.xlu0 %493
  %497 = vset.pattern.permute.xlu0 0
  %498 = vperm.xlu0 %497, %v476
  %v499 = vpop.permute.xlu0 %498
  %v501 = vsub.f32 %v398, %v489
  %v502 = vsub.f32 %v399, %v489
  %v503 = vsub.f32 %v400, %v489
  %v504 = vsub.f32 %v401, %v494
  %v505 = vsub.f32 %v402, %v494
  %v506 = vsub.f32 %v403, %v494
  %v507 = vsub.f32 %v404, %v499
  %v508 = vsub.f32 %v405, %v499
  %v509 = vsub.f32 %v406, %v499
  %v510 = vmul.f32 %v501, 1.442695
  %v511 = vpow.pop %v510
  %v512 = vmul.f32 %v502, 1.442695
  %v513 = vpow.pop %v512
  %v514 = vmul.f32 %v503, 1.442695
  %v515 = vpow.pop %v514
  %v516 = vmul.f32 %v504, 1.442695
  %v517 = vpow.pop %v516
  %v518 = vmul.f32 %v505, 1.442695
  %v519 = vpow.pop %v518
  %v520 = vmul.f32 %v506, 1.442695
  %v521 = vpow.pop %v520
  %v522 = vmul.f32 %v507, 1.442695
  %v523 = vpow.pop %v522
  %v524 = vmul.f32 %v508, 1.442695
  %v525 = vpow.pop %v524
  %v526 = vmul.f32 %v509, 1.442695
  %v527 = vpow.pop %v526
  %v528 = vld [vmem:[#allocation3] sm:$0xff]
  %v529 = vld [vmem:[#allocation3 + $0x8] sm:$0xff]
  %v530 = vld [vmem:[#allocation3 + $0x10] sm:$0xff]
  %v531 = vmul.f32 %v481, %v528
  %v532 = vmul.f32 %v483, %v529
  %v533 = vmul.f32 %v485, %v530
  %v534 = vadd.f32 %v511, %v513
  %v535 = vadd.f32 %v534, %v515
  %536 = vadd.xlane.f32.xlu0 %v535
  %v537 = vpop.xlane.xlu0 %536
  %v538 = vadd.f32 %v517, %v519
  %v539 = vadd.f32 %v538, %v521
  %540 = vadd.xlane.f32.xlu0 %v539
  %v541 = vpop.xlane.xlu0 %540
  %v542 = vadd.f32 %v523, %v525
  %v543 = vadd.f32 %v542, %v527
  %544 = vadd.xlane.f32.xlu0 %v543
  %v545 = vpop.xlane.xlu0 %544
  %v546 = vadd.f32 %v531, %v537
  %v547 = vadd.f32 %v532, %v541
  %v548 = vadd.f32 %v533, %v545
  %549 = vst.msk [vmem:[#allocation3] sm:$0xff] %vm455, %v546
  %550 = vst.msk [vmem:[#allocation3 + $0x8] sm:$0xff] %vm455, %v547
  %551 = vst.msk [vmem:[#allocation3 + $0x10] sm:$0xff] %vm455, %v548
  %552 = vst.msk [vmem:[#allocation2] sm:$0xff] %vm455, %v474
  %553 = vst.msk [vmem:[#allocation2 + $0x8] sm:$0xff] %vm455, %v475
  %554 = vst.msk [vmem:[#allocation2 + $0x10] sm:$0xff] %vm455, %v476
  // Predicated region
  $region18: #{tpu_custom_call.1} parent=0 // pred_check
    %p555 = pneg %p15
  $region19: #{tpu_custom_call.1} parent=0 // pred_check_branch
    %557 = sbr.rel (%p555) target = $region21
  $region20: #{tpu_custom_call.1} parent=0 // pred_region
    %v558 = vld [vmem:[#allocation2] sm:$0xff]
    %v559 = vld [vmem:[#allocation2 + $0x8] sm:$0xff]
    %v560 = vld [vmem:[#allocation2 + $0x10] sm:$0xff]
    %v561 = vld [vmem:[#allocation3] sm:$0xff]
    %v562 = vld [vmem:[#allocation3 + $0x8] sm:$0xff]
    %v563 = vld [vmem:[#allocation3 + $0x10] sm:$0xff]
    %v564 = vlog2.pop %v561
    %v565 = vmul.f32 %v564, 0.6931472
    %v566 = vlog2.pop %v562
    %v567 = vmul.f32 %v566, 0.6931472
    %v568 = vlog2.pop %v563
    %v569 = vmul.f32 %v568, 0.6931472
    %v570 = vadd.f32 %v558, %v565
    %v571 = vadd.f32 %v559, %v567
    %v572 = vadd.f32 %v560, %v569
    %v573 = vld [vmem:[#allocation4] sm:$0xff]
    %v574 = vld [vmem:[#allocation4 + $0x8] sm:$0xff]
    %v575 = vld [vmem:[#allocation4 + $0x10] sm:$0xff]
    %v576 = vsub.f32 %v570, %v573
    %v577 = vsub.f32 %v571, %v574
    %v578 = vsub.f32 %v572, %v575
    %v579 = vlaneseq
    %v580 = vshrl.u32 %v579, 7
    %v581 = vadd.s32 %v580, 8
    %v582 = vadd.s32 %v580, 16
    %s583 = smul.u32 0, 24
    %v584 = vstv %s583
    %v585 = vadd.s32 %v580, %v584
    %v586 = vadd.s32 %v581, %v584
    %v587 = vadd.s32 %v582, %v584
    %vm588 = vcmp.lt.s32.totalorder %v585, 24
    %vm589 = vcmp.lt.s32.totalorder %v586, 24
    %vm590 = vcmp.lt.s32.totalorder %v587, 24
    %v591 = vsel %vm588, %v576, 0.0
    %v592 = vsel %vm589, %v577, 0.0
    %v593 = vsel %vm590, %v578, 0.0
    %594 = vst.msk [vmem:[%s3] sm:$0xff] %vm455, %v591
    %595 = vst.msk [vmem:[%s3 + $0x8] sm:$0xff] %vm455, %v592
    %596 = vst.msk [vmem:[%s3 + $0x10] sm:$0xff] %vm455, %v593
  $region21: #{tpu_custom_call.1} parent=0 // pred_fallthru
    _
  // Predicated region
  $region22: #{tpu_custom_call.1} parent=0 // pred_check
    _
  $region23: #{tpu_custom_call.1} parent=0 // pred_check_branch
    %598 = sbr.rel (0) target = $region25
  $region24: #{tpu_custom_call.1} parent=0 // pred_region
    _
  $region25: #{tpu_custom_call.1} parent=0 // pred_fallthru
    _
  // Predicated region
  $region26: #{tpu_custom_call.1} parent=0 // pred_check
    _
  $region27: #{tpu_custom_call.1} parent=0 // pred_check_branch
    %600 = sbr.rel (0) target = $region29
  $region28: #{tpu_custom_call.1} parent=0 // pred_region
    _
  $region29: #{tpu_custom_call.1} parent=0 // pred_fallthru
    _

</llo_original>
